<compile_context>
chip_gen: v5e
topology: v5e:2x2
jax: 0.10.0
libtpu: 0.0.40
codegen_flags: <defaults>
</compile_context>

<pallas_src>
import jax
import jax.numpy as jnp
from jax.experimental import pallas as pl
from jax.experimental.pallas import tpu as pltpu


def lstm_mlp_kernel(x_ref, wih_ref, whh_ref, b_ref,
                    w1_ref, b1_ref, w2_ref, b2_ref, out_ref):
    BT, _ = x_ref.shape            # B*T rows: row b*T + t is (b, t)
    H = whh_ref.shape[0]
    B = out_ref.shape[0]
    T = BT // B

    # (1) One MXU matmul for the input projection of ALL timesteps, combined
    # bias folded in once.  Kept as a register value; regrouped so that
    # gx[b, t, :] are the input-side gate pre-activations of (b, t).
    gx = (jnp.dot(x_ref[...], wih_ref[...],
                  preferred_element_type=jnp.float32) + b_ref[...])
    gx = gx.reshape(B, T, 4 * H)

    whh = whh_ref[...]             # hoisted: loaded once, reused every step

    # (2) Serial recurrence: only h @ W_hh + gate math on the critical path.
    # Gate order is (i, f, o, g); g columns pre-scaled by 2 at pack time, so a
    # single sigmoid over all 4H lanes suffices and tanh(g) = 2*sigmoid(2g)-1.
    h = jnp.zeros((B, H), jnp.float32)
    c = jnp.zeros((B, H), jnp.float32)
    for t in range(T):             # fully unrolled, static indices
        g = gx[:, t, :] + jnp.dot(h, whh, preferred_element_type=jnp.float32)
        s = jax.nn.sigmoid(g)                 # one EUP push over (B, 4H)
        i_g = s[:, 0 * H:1 * H]
        f_g = s[:, 1 * H:2 * H]
        o_g = s[:, 2 * H:3 * H]
        g_g = 2.0 * s[:, 3 * H:] - 1.0        # == tanh(original g pre-act)
        c = f_g * c + i_g * g_g
        h = o_g * jnp.tanh(c)

    # (3) Head on the final hidden state: fc1 -> relu -> fc2.
    z = jnp.maximum(
        jnp.dot(h, w1_ref[...], preferred_element_type=jnp.float32) + b1_ref[...],
        0.0)
    y = jnp.dot(z, w2_ref[...], preferred_element_type=jnp.float32) + b2_ref[...]
    out_ref[...] = y.astype(out_ref.dtype)


def lstm_model_forward(x, params):
    """x: (B, T, I) float32 (PyTorch batch_first layout). Returns (B, num_classes)."""
    (w_ih_t, w_hh_t, b_gates, w1_t, b1, w2_t, b2) = params
    B, T, I = x.shape
    C = w2_t.shape[1]

    # Free contiguous reshape (NO transpose HLO): row b*T + t is x[b, t].
    x2d = x.reshape(B * T, I)

    vmem = lambda: pl.BlockSpec(memory_space=pltpu.MemorySpace.VMEM)

    out = pl.pallas_call(
        lstm_mlp_kernel,
        out_shape=jax.ShapeDtypeStruct((B, C), jnp.float32),
        in_specs=[vmem() for _ in range(8)],     # everything resident in VMEM (~40 KiB)
        out_specs=vmem(),
    )(x2d, w_ih_t, w_hh_t, b_gates, w1_t, b1, w2_t, b2)
    return out


def init_raw_params(key, input_size, lstm_units, dense_units, num_classes):
    """Raw PyTorch-layout parameters (gate order i, f, g, o)."""
    ks = jax.random.split(key, 8)
    scale = 0.1
    w_ih = scale * jax.random.normal(ks[0], (4 * lstm_units, input_size), jnp.float32)
    w_hh = scale * jax.random.normal(ks[1], (4 * lstm_units, lstm_units), jnp.float32)
    b_ih = scale * jax.random.normal(ks[2], (4 * lstm_units,), jnp.float32)
    b_hh = scale * jax.random.normal(ks[3], (4 * lstm_units,), jnp.float32)
    w1 = scale * jax.random.normal(ks[4], (dense_units, lstm_units), jnp.float32)
    b1 = scale * jax.random.normal(ks[5], (dense_units,), jnp.float32)
    w2 = scale * jax.random.normal(ks[6], (num_classes, dense_units), jnp.float32)
    b2 = scale * jax.random.normal(ks[7], (num_classes,), jnp.float32)
    return (w_ih, w_hh, b_ih, b_hh, w1, b1, w2, b2)


def pack_params(raw):
    """Kernel layout: gate rows reordered (i, f, g, o) -> (i, f, o, g), weights
    transposed to (in, out), LSTM biases combined, and the g-gate columns
    pre-scaled by 2 so the kernel can use tanh(z) = 2*sigmoid(2z) - 1."""
    w_ih, w_hh, b_ih, b_hh, w1, b1, w2, b2 = raw
    H = w_hh.shape[1]
    perm = jnp.concatenate([
        jnp.arange(0, 2 * H),        # i, f
        jnp.arange(3 * H, 4 * H),    # o
        jnp.arange(2 * H, 3 * H),    # g
    ])
    w_ih_r = w_ih[perm].T            # (I, 4H)
    w_hh_r = w_hh[perm].T            # (H, 4H)
    b_r = (b_ih + b_hh)[perm]        # (4H,)

    # Fold the 2x into the (trailing) g-gate columns — exact in f32.
    gate_scale = jnp.concatenate([jnp.ones((3 * H,), jnp.float32),
                                  jnp.full((H,), 2.0, jnp.float32)])
    w_ih_r = w_ih_r * gate_scale[None, :]
    w_hh_r = w_hh_r * gate_scale[None, :]
    b_r = b_r * gate_scale

    return (w_ih_r, w_hh_r, b_r[None, :],
            w1.T, b1[None, :], w2.T, b2[None, :])


def reference_forward(x, raw):
    """Pure-JAX reference mirroring torch semantics (raw PyTorch layout)."""
    w_ih, w_hh, b_ih, b_hh, w1, b1, w2, b2 = raw
    B, T, I = x.shape
    H = w_hh.shape[1]
    h = jnp.zeros((B, H), jnp.float32)
    c = jnp.zeros((B, H), jnp.float32)

    def step(carry, x_t):
        h, c = carry
        gates = x_t @ w_ih.T + h @ w_hh.T + b_ih + b_hh
        i = jax.nn.sigmoid(gates[:, 0 * H:1 * H])
        f = jax.nn.sigmoid(gates[:, 1 * H:2 * H])
        g = jnp.tanh(gates[:, 2 * H:3 * H])
        o = jax.nn.sigmoid(gates[:, 3 * H:4 * H])
        c = f * c + i * g
        h = o * jnp.tanh(c)
        return (h, c), None

    (h, c), _ = jax.lax.scan(step, (h, c), jnp.transpose(x, (1, 0, 2)))
    z = jnp.maximum(h @ w1.T + b1, 0.0)
    return z @ w2.T + b2


if __name__ == "__main__":
    batch, seq, input_size = 2, 8, 16
    lstm_units, dense_units, num_classes = 32, 32, 8

    key = jax.random.PRNGKey(0)
    k_x, k_p = jax.random.split(key)
    x = jax.random.normal(k_x, (batch, seq, input_size), jnp.float32)

    raw = init_raw_params(k_p, input_size, lstm_units, dense_units, num_classes)
    params = pack_params(raw)

    out = jax.block_until_ready(lstm_model_forward(x, params))
    ref = jax.block_until_ready(reference_forward(x, raw))

    assert out.shape == (batch, num_classes)
    # tanh-via-sigmoid fold is mathematically exact but not bit-identical to
    # jnp.tanh; deviation is ~1e-6-level, so use a slightly relaxed tolerance.
    assert jnp.allclose(out, ref, atol=1e-4, rtol=1e-4), (out, ref)
    print("KERNEL_OK")
</pallas_src>

<mosaic_0001>
module attributes {stable_mosaic.version = 11 : i64} {
  func.func @lstm_mlp_kernel(%arg0: memref<16x16xf32, #tpu.memory_space<vmem>>, %arg1: memref<16x128xf32, #tpu.memory_space<vmem>>, %arg2: memref<32x128xf32, #tpu.memory_space<vmem>>, %arg3: memref<1x128xf32, #tpu.memory_space<vmem>>, %arg4: memref<32x32xf32, #tpu.memory_space<vmem>>, %arg5: memref<1x32xf32, #tpu.memory_space<vmem>>, %arg6: memref<32x8xf32, #tpu.memory_space<vmem>>, %arg7: memref<1x8xf32, #tpu.memory_space<vmem>>, %arg8: memref<2x8xf32, #tpu.memory_space<vmem>>) attributes {dimension_semantics = [], scalar_prefetch = 0 : i64, scratch_operands = 0 : i64, tpu.core_type = #tpu.core_type<tc>} {
    %c0 = arith.constant 0 : index
    %c0_0 = arith.constant 0 : index
    %0 = vector.load %arg0[%c0, %c0_0] : memref<16x16xf32, #tpu.memory_space<vmem>>, vector<16x16xf32>
    %c0_1 = arith.constant 0 : index
    %c0_2 = arith.constant 0 : index
    %1 = vector.load %arg1[%c0_1, %c0_2] : memref<16x128xf32, #tpu.memory_space<vmem>>, vector<16x128xf32>
    %cst = arith.constant dense<0.000000e+00> : vector<16x128xf32>
    %2 = tpu.matmul %0, %1, %cst {dimension_numbers = #tpu.dot_dimension_numbers<[1], [0], [0], [1], [0, 0, 1, 1], [], []>} : vector<16x16xf32>, vector<16x128xf32>, vector<16x128xf32> -> vector<16x128xf32>
    %c0_3 = arith.constant 0 : index
    %c0_4 = arith.constant 0 : index
    %3 = vector.load %arg3[%c0_3, %c0_4] : memref<1x128xf32, #tpu.memory_space<vmem>>, vector<1x128xf32>
    %4 = vector.broadcast %3 : vector<1x128xf32> to vector<16x128xf32>
    %5 = arith.addf %2, %4 : vector<16x128xf32>
    %6 = vector.shape_cast %5 : vector<16x128xf32> to vector<2x8x128xf32>
    %c0_5 = arith.constant 0 : index
    %c0_6 = arith.constant 0 : index
    %7 = vector.load %arg2[%c0_5, %c0_6] : memref<32x128xf32, #tpu.memory_space<vmem>>, vector<32x128xf32>
    %cst_7 = arith.constant 0.000000e+00 : f32
    %8 = vector.broadcast %cst_7 : f32 to vector<2x32xf32>
    %cst_8 = arith.constant 0.000000e+00 : f32
    %9 = vector.broadcast %cst_8 : f32 to vector<2x32xf32>
    %10 = vector.extract_strided_slice %6 {offsets = [0, 0, 0], sizes = [2, 1, 128], strides = [1, 1, 1]} : vector<2x8x128xf32> to vector<2x1x128xf32>
    %11 = vector.shape_cast %10 : vector<2x1x128xf32> to vector<2x128xf32>
    %cst_9 = arith.constant dense<0.000000e+00> : vector<2x128xf32>
    %12 = tpu.matmul %8, %7, %cst_9 {dimension_numbers = #tpu.dot_dimension_numbers<[1], [0], [0], [1], [0, 0, 1, 1], [], []>} : vector<2x32xf32>, vector<32x128xf32>, vector<2x128xf32> -> vector<2x128xf32>
    %13 = arith.addf %11, %12 : vector<2x128xf32>
    %14 = arith.negf %13 : vector<2x128xf32>
    %15 = math.exp %14 : vector<2x128xf32>
    %cst_10 = arith.constant 1.000000e+00 : f32
    %16 = vector.broadcast %cst_10 : f32 to vector<2x128xf32>
    %17 = arith.addf %16, %15 : vector<2x128xf32>
    %18 = arith.divf %16, %17 : vector<2x128xf32>
    %19 = vector.extract_strided_slice %18 {offsets = [0, 0], sizes = [2, 32], strides = [1, 1]} : vector<2x128xf32> to vector<2x32xf32>
    %20 = vector.extract_strided_slice %18 {offsets = [0, 32], sizes = [2, 32], strides = [1, 1]} : vector<2x128xf32> to vector<2x32xf32>
    %21 = vector.extract_strided_slice %18 {offsets = [0, 64], sizes = [2, 32], strides = [1, 1]} : vector<2x128xf32> to vector<2x32xf32>
    %22 = vector.extract_strided_slice %18 {offsets = [0, 96], sizes = [2, 32], strides = [1, 1]} : vector<2x128xf32> to vector<2x32xf32>
    %cst_11 = arith.constant 2.000000e+00 : f32
    %23 = vector.broadcast %cst_11 : f32 to vector<2x32xf32>
    %24 = arith.mulf %23, %22 : vector<2x32xf32>
    %cst_12 = arith.constant 1.000000e+00 : f32
    %25 = vector.broadcast %cst_12 : f32 to vector<2x32xf32>
    %26 = arith.subf %24, %25 : vector<2x32xf32>
    %27 = arith.mulf %20, %9 : vector<2x32xf32>
    %28 = arith.mulf %19, %26 : vector<2x32xf32>
    %29 = arith.addf %27, %28 : vector<2x32xf32>
    %30 = math.tanh %29 : vector<2x32xf32>
    %31 = arith.mulf %21, %30 : vector<2x32xf32>
    %32 = vector.extract_strided_slice %6 {offsets = [0, 1, 0], sizes = [2, 1, 128], strides = [1, 1, 1]} : vector<2x8x128xf32> to vector<2x1x128xf32>
    %33 = vector.shape_cast %32 : vector<2x1x128xf32> to vector<2x128xf32>
    %cst_13 = arith.constant dense<0.000000e+00> : vector<2x128xf32>
    %34 = tpu.matmul %31, %7, %cst_13 {dimension_numbers = #tpu.dot_dimension_numbers<[1], [0], [0], [1], [0, 0, 1, 1], [], []>} : vector<2x32xf32>, vector<32x128xf32>, vector<2x128xf32> -> vector<2x128xf32>
    %35 = arith.addf %33, %34 : vector<2x128xf32>
    %36 = arith.negf %35 : vector<2x128xf32>
    %37 = math.exp %36 : vector<2x128xf32>
    %cst_14 = arith.constant 1.000000e+00 : f32
    %38 = vector.broadcast %cst_14 : f32 to vector<2x128xf32>
    %39 = arith.addf %38, %37 : vector<2x128xf32>
    %40 = arith.divf %38, %39 : vector<2x128xf32>
    %41 = vector.extract_strided_slice %40 {offsets = [0, 0], sizes = [2, 32], strides = [1, 1]} : vector<2x128xf32> to vector<2x32xf32>
    %42 = vector.extract_strided_slice %40 {offsets = [0, 32], sizes = [2, 32], strides = [1, 1]} : vector<2x128xf32> to vector<2x32xf32>
    %43 = vector.extract_strided_slice %40 {offsets = [0, 64], sizes = [2, 32], strides = [1, 1]} : vector<2x128xf32> to vector<2x32xf32>
    %44 = vector.extract_strided_slice %40 {offsets = [0, 96], sizes = [2, 32], strides = [1, 1]} : vector<2x128xf32> to vector<2x32xf32>
    %cst_15 = arith.constant 2.000000e+00 : f32
    %45 = vector.broadcast %cst_15 : f32 to vector<2x32xf32>
    %46 = arith.mulf %45, %44 : vector<2x32xf32>
    %cst_16 = arith.constant 1.000000e+00 : f32
    %47 = vector.broadcast %cst_16 : f32 to vector<2x32xf32>
    %48 = arith.subf %46, %47 : vector<2x32xf32>
    %49 = arith.mulf %42, %29 : vector<2x32xf32>
    %50 = arith.mulf %41, %48 : vector<2x32xf32>
    %51 = arith.addf %49, %50 : vector<2x32xf32>
    %52 = math.tanh %51 : vector<2x32xf32>
    %53 = arith.mulf %43, %52 : vector<2x32xf32>
    %54 = vector.extract_strided_slice %6 {offsets = [0, 2, 0], sizes = [2, 1, 128], strides = [1, 1, 1]} : vector<2x8x128xf32> to vector<2x1x128xf32>
    %55 = vector.shape_cast %54 : vector<2x1x128xf32> to vector<2x128xf32>
    %cst_17 = arith.constant dense<0.000000e+00> : vector<2x128xf32>
    %56 = tpu.matmul %53, %7, %cst_17 {dimension_numbers = #tpu.dot_dimension_numbers<[1], [0], [0], [1], [0, 0, 1, 1], [], []>} : vector<2x32xf32>, vector<32x128xf32>, vector<2x128xf32> -> vector<2x128xf32>
    %57 = arith.addf %55, %56 : vector<2x128xf32>
    %58 = arith.negf %57 : vector<2x128xf32>
    %59 = math.exp %58 : vector<2x128xf32>
    %cst_18 = arith.constant 1.000000e+00 : f32
    %60 = vector.broadcast %cst_18 : f32 to vector<2x128xf32>
    %61 = arith.addf %60, %59 : vector<2x128xf32>
    %62 = arith.divf %60, %61 : vector<2x128xf32>
    %63 = vector.extract_strided_slice %62 {offsets = [0, 0], sizes = [2, 32], strides = [1, 1]} : vector<2x128xf32> to vector<2x32xf32>
    %64 = vector.extract_strided_slice %62 {offsets = [0, 32], sizes = [2, 32], strides = [1, 1]} : vector<2x128xf32> to vector<2x32xf32>
    %65 = vector.extract_strided_slice %62 {offsets = [0, 64], sizes = [2, 32], strides = [1, 1]} : vector<2x128xf32> to vector<2x32xf32>
    %66 = vector.extract_strided_slice %62 {offsets = [0, 96], sizes = [2, 32], strides = [1, 1]} : vector<2x128xf32> to vector<2x32xf32>
    %cst_19 = arith.constant 2.000000e+00 : f32
    %67 = vector.broadcast %cst_19 : f32 to vector<2x32xf32>
    %68 = arith.mulf %67, %66 : vector<2x32xf32>
    %cst_20 = arith.constant 1.000000e+00 : f32
    %69 = vector.broadcast %cst_20 : f32 to vector<2x32xf32>
    %70 = arith.subf %68, %69 : vector<2x32xf32>
    %71 = arith.mulf %64, %51 : vector<2x32xf32>
    %72 = arith.mulf %63, %70 : vector<2x32xf32>
    %73 = arith.addf %71, %72 : vector<2x32xf32>
    %74 = math.tanh %73 : vector<2x32xf32>
    %75 = arith.mulf %65, %74 : vector<2x32xf32>
    %76 = vector.extract_strided_slice %6 {offsets = [0, 3, 0], sizes = [2, 1, 128], strides = [1, 1, 1]} : vector<2x8x128xf32> to vector<2x1x128xf32>
    %77 = vector.shape_cast %76 : vector<2x1x128xf32> to vector<2x128xf32>
    %cst_21 = arith.constant dense<0.000000e+00> : vector<2x128xf32>
    %78 = tpu.matmul %75, %7, %cst_21 {dimension_numbers = #tpu.dot_dimension_numbers<[1], [0], [0], [1], [0, 0, 1, 1], [], []>} : vector<2x32xf32>, vector<32x128xf32>, vector<2x128xf32> -> vector<2x128xf32>
    %79 = arith.addf %77, %78 : vector<2x128xf32>
    %80 = arith.negf %79 : vector<2x128xf32>
    %81 = math.exp %80 : vector<2x128xf32>
    %cst_22 = arith.constant 1.000000e+00 : f32
    %82 = vector.broadcast %cst_22 : f32 to vector<2x128xf32>
    %83 = arith.addf %82, %81 : vector<2x128xf32>
    %84 = arith.divf %82, %83 : vector<2x128xf32>
    %85 = vector.extract_strided_slice %84 {offsets = [0, 0], sizes = [2, 32], strides = [1, 1]} : vector<2x128xf32> to vector<2x32xf32>
    %86 = vector.extract_strided_slice %84 {offsets = [0, 32], sizes = [2, 32], strides = [1, 1]} : vector<2x128xf32> to vector<2x32xf32>
    %87 = vector.extract_strided_slice %84 {offsets = [0, 64], sizes = [2, 32], strides = [1, 1]} : vector<2x128xf32> to vector<2x32xf32>
    %88 = vector.extract_strided_slice %84 {offsets = [0, 96], sizes = [2, 32], strides = [1, 1]} : vector<2x128xf32> to vector<2x32xf32>
    %cst_23 = arith.constant 2.000000e+00 : f32
    %89 = vector.broadcast %cst_23 : f32 to vector<2x32xf32>
    %90 = arith.mulf %89, %88 : vector<2x32xf32>
    %cst_24 = arith.constant 1.000000e+00 : f32
    %91 = vector.broadcast %cst_24 : f32 to vector<2x32xf32>
    %92 = arith.subf %90, %91 : vector<2x32xf32>
    %93 = arith.mulf %86, %73 : vector<2x32xf32>
    %94 = arith.mulf %85, %92 : vector<2x32xf32>
    %95 = arith.addf %93, %94 : vector<2x32xf32>
    %96 = math.tanh %95 : vector<2x32xf32>
    %97 = arith.mulf %87, %96 : vector<2x32xf32>
    %98 = vector.extract_strided_slice %6 {offsets = [0, 4, 0], sizes = [2, 1, 128], strides = [1, 1, 1]} : vector<2x8x128xf32> to vector<2x1x128xf32>
    %99 = vector.shape_cast %98 : vector<2x1x128xf32> to vector<2x128xf32>
    %cst_25 = arith.constant dense<0.000000e+00> : vector<2x128xf32>
    %100 = tpu.matmul %97, %7, %cst_25 {dimension_numbers = #tpu.dot_dimension_numbers<[1], [0], [0], [1], [0, 0, 1, 1], [], []>} : vector<2x32xf32>, vector<32x128xf32>, vector<2x128xf32> -> vector<2x128xf32>
    %101 = arith.addf %99, %100 : vector<2x128xf32>
    %102 = arith.negf %101 : vector<2x128xf32>
    %103 = math.exp %102 : vector<2x128xf32>
    %cst_26 = arith.constant 1.000000e+00 : f32
    %104 = vector.broadcast %cst_26 : f32 to vector<2x128xf32>
    %105 = arith.addf %104, %103 : vector<2x128xf32>
    %106 = arith.divf %104, %105 : vector<2x128xf32>
    %107 = vector.extract_strided_slice %106 {offsets = [0, 0], sizes = [2, 32], strides = [1, 1]} : vector<2x128xf32> to vector<2x32xf32>
    %108 = vector.extract_strided_slice %106 {offsets = [0, 32], sizes = [2, 32], strides = [1, 1]} : vector<2x128xf32> to vector<2x32xf32>
    %109 = vector.extract_strided_slice %106 {offsets = [0, 64], sizes = [2, 32], strides = [1, 1]} : vector<2x128xf32> to vector<2x32xf32>
    %110 = vector.extract_strided_slice %106 {offsets = [0, 96], sizes = [2, 32], strides = [1, 1]} : vector<2x128xf32> to vector<2x32xf32>
    %cst_27 = arith.constant 2.000000e+00 : f32
    %111 = vector.broadcast %cst_27 : f32 to vector<2x32xf32>
    %112 = arith.mulf %111, %110 : vector<2x32xf32>
    %cst_28 = arith.constant 1.000000e+00 : f32
    %113 = vector.broadcast %cst_28 : f32 to vector<2x32xf32>
    %114 = arith.subf %112, %113 : vector<2x32xf32>
    %115 = arith.mulf %108, %95 : vector<2x32xf32>
    %116 = arith.mulf %107, %114 : vector<2x32xf32>
    %117 = arith.addf %115, %116 : vector<2x32xf32>
    %118 = math.tanh %117 : vector<2x32xf32>
    %119 = arith.mulf %109, %118 : vector<2x32xf32>
    %120 = vector.extract_strided_slice %6 {offsets = [0, 5, 0], sizes = [2, 1, 128], strides = [1, 1, 1]} : vector<2x8x128xf32> to vector<2x1x128xf32>
    %121 = vector.shape_cast %120 : vector<2x1x128xf32> to vector<2x128xf32>
    %cst_29 = arith.constant dense<0.000000e+00> : vector<2x128xf32>
    %122 = tpu.matmul %119, %7, %cst_29 {dimension_numbers = #tpu.dot_dimension_numbers<[1], [0], [0], [1], [0, 0, 1, 1], [], []>} : vector<2x32xf32>, vector<32x128xf32>, vector<2x128xf32> -> vector<2x128xf32>
    %123 = arith.addf %121, %122 : vector<2x128xf32>
    %124 = arith.negf %123 : vector<2x128xf32>
    %125 = math.exp %124 : vector<2x128xf32>
    %cst_30 = arith.constant 1.000000e+00 : f32
    %126 = vector.broadcast %cst_30 : f32 to vector<2x128xf32>
    %127 = arith.addf %126, %125 : vector<2x128xf32>
    %128 = arith.divf %126, %127 : vector<2x128xf32>
    %129 = vector.extract_strided_slice %128 {offsets = [0, 0], sizes = [2, 32], strides = [1, 1]} : vector<2x128xf32> to vector<2x32xf32>
    %130 = vector.extract_strided_slice %128 {offsets = [0, 32], sizes = [2, 32], strides = [1, 1]} : vector<2x128xf32> to vector<2x32xf32>
    %131 = vector.extract_strided_slice %128 {offsets = [0, 64], sizes = [2, 32], strides = [1, 1]} : vector<2x128xf32> to vector<2x32xf32>
    %132 = vector.extract_strided_slice %128 {offsets = [0, 96], sizes = [2, 32], strides = [1, 1]} : vector<2x128xf32> to vector<2x32xf32>
    %cst_31 = arith.constant 2.000000e+00 : f32
    %133 = vector.broadcast %cst_31 : f32 to vector<2x32xf32>
    %134 = arith.mulf %133, %132 : vector<2x32xf32>
    %cst_32 = arith.constant 1.000000e+00 : f32
    %135 = vector.broadcast %cst_32 : f32 to vector<2x32xf32>
    %136 = arith.subf %134, %135 : vector<2x32xf32>
    %137 = arith.mulf %130, %117 : vector<2x32xf32>
    %138 = arith.mulf %129, %136 : vector<2x32xf32>
    %139 = arith.addf %137, %138 : vector<2x32xf32>
    %140 = math.tanh %139 : vector<2x32xf32>
    %141 = arith.mulf %131, %140 : vector<2x32xf32>
    %142 = vector.extract_strided_slice %6 {offsets = [0, 6, 0], sizes = [2, 1, 128], strides = [1, 1, 1]} : vector<2x8x128xf32> to vector<2x1x128xf32>
    %143 = vector.shape_cast %142 : vector<2x1x128xf32> to vector<2x128xf32>
    %cst_33 = arith.constant dense<0.000000e+00> : vector<2x128xf32>
    %144 = tpu.matmul %141, %7, %cst_33 {dimension_numbers = #tpu.dot_dimension_numbers<[1], [0], [0], [1], [0, 0, 1, 1], [], []>} : vector<2x32xf32>, vector<32x128xf32>, vector<2x128xf32> -> vector<2x128xf32>
    %145 = arith.addf %143, %144 : vector<2x128xf32>
    %146 = arith.negf %145 : vector<2x128xf32>
    %147 = math.exp %146 : vector<2x128xf32>
    %cst_34 = arith.constant 1.000000e+00 : f32
    %148 = vector.broadcast %cst_34 : f32 to vector<2x128xf32>
    %149 = arith.addf %148, %147 : vector<2x128xf32>
    %150 = arith.divf %148, %149 : vector<2x128xf32>
    %151 = vector.extract_strided_slice %150 {offsets = [0, 0], sizes = [2, 32], strides = [1, 1]} : vector<2x128xf32> to vector<2x32xf32>
    %152 = vector.extract_strided_slice %150 {offsets = [0, 32], sizes = [2, 32], strides = [1, 1]} : vector<2x128xf32> to vector<2x32xf32>
    %153 = vector.extract_strided_slice %150 {offsets = [0, 64], sizes = [2, 32], strides = [1, 1]} : vector<2x128xf32> to vector<2x32xf32>
    %154 = vector.extract_strided_slice %150 {offsets = [0, 96], sizes = [2, 32], strides = [1, 1]} : vector<2x128xf32> to vector<2x32xf32>
    %cst_35 = arith.constant 2.000000e+00 : f32
    %155 = vector.broadcast %cst_35 : f32 to vector<2x32xf32>
    %156 = arith.mulf %155, %154 : vector<2x32xf32>
    %cst_36 = arith.constant 1.000000e+00 : f32
    %157 = vector.broadcast %cst_36 : f32 to vector<2x32xf32>
    %158 = arith.subf %156, %157 : vector<2x32xf32>
    %159 = arith.mulf %152, %139 : vector<2x32xf32>
    %160 = arith.mulf %151, %158 : vector<2x32xf32>
    %161 = arith.addf %159, %160 : vector<2x32xf32>
    %162 = math.tanh %161 : vector<2x32xf32>
    %163 = arith.mulf %153, %162 : vector<2x32xf32>
    %164 = vector.extract_strided_slice %6 {offsets = [0, 7, 0], sizes = [2, 1, 128], strides = [1, 1, 1]} : vector<2x8x128xf32> to vector<2x1x128xf32>
    %165 = vector.shape_cast %164 : vector<2x1x128xf32> to vector<2x128xf32>
    %cst_37 = arith.constant dense<0.000000e+00> : vector<2x128xf32>
    %166 = tpu.matmul %163, %7, %cst_37 {dimension_numbers = #tpu.dot_dimension_numbers<[1], [0], [0], [1], [0, 0, 1, 1], [], []>} : vector<2x32xf32>, vector<32x128xf32>, vector<2x128xf32> -> vector<2x128xf32>
    %167 = arith.addf %165, %166 : vector<2x128xf32>
    %168 = arith.negf %167 : vector<2x128xf32>
    %169 = math.exp %168 : vector<2x128xf32>
    %cst_38 = arith.constant 1.000000e+00 : f32
    %170 = vector.broadcast %cst_38 : f32 to vector<2x128xf32>
    %171 = arith.addf %170, %169 : vector<2x128xf32>
    %172 = arith.divf %170, %171 : vector<2x128xf32>
    %173 = vector.extract_strided_slice %172 {offsets = [0, 0], sizes = [2, 32], strides = [1, 1]} : vector<2x128xf32> to vector<2x32xf32>
    %174 = vector.extract_strided_slice %172 {offsets = [0, 32], sizes = [2, 32], strides = [1, 1]} : vector<2x128xf32> to vector<2x32xf32>
    %175 = vector.extract_strided_slice %172 {offsets = [0, 64], sizes = [2, 32], strides = [1, 1]} : vector<2x128xf32> to vector<2x32xf32>
    %176 = vector.extract_strided_slice %172 {offsets = [0, 96], sizes = [2, 32], strides = [1, 1]} : vector<2x128xf32> to vector<2x32xf32>
    %cst_39 = arith.constant 2.000000e+00 : f32
    %177 = vector.broadcast %cst_39 : f32 to vector<2x32xf32>
    %178 = arith.mulf %177, %176 : vector<2x32xf32>
    %cst_40 = arith.constant 1.000000e+00 : f32
    %179 = vector.broadcast %cst_40 : f32 to vector<2x32xf32>
    %180 = arith.subf %178, %179 : vector<2x32xf32>
    %181 = arith.mulf %174, %161 : vector<2x32xf32>
    %182 = arith.mulf %173, %180 : vector<2x32xf32>
    %183 = arith.addf %181, %182 : vector<2x32xf32>
    %184 = math.tanh %183 : vector<2x32xf32>
    %185 = arith.mulf %175, %184 : vector<2x32xf32>
    %c0_41 = arith.constant 0 : index
    %c0_42 = arith.constant 0 : index
    %186 = vector.load %arg4[%c0_41, %c0_42] : memref<32x32xf32, #tpu.memory_space<vmem>>, vector<32x32xf32>
    %cst_43 = arith.constant dense<0.000000e+00> : vector<2x32xf32>
    %187 = tpu.matmul %185, %186, %cst_43 {dimension_numbers = #tpu.dot_dimension_numbers<[1], [0], [0], [1], [0, 0, 1, 1], [], []>} : vector<2x32xf32>, vector<32x32xf32>, vector<2x32xf32> -> vector<2x32xf32>
    %c0_44 = arith.constant 0 : index
    %c0_45 = arith.constant 0 : index
    %188 = vector.load %arg5[%c0_44, %c0_45] : memref<1x32xf32, #tpu.memory_space<vmem>>, vector<1x32xf32>
    %189 = vector.broadcast %188 : vector<1x32xf32> to vector<2x32xf32>
    %190 = arith.addf %187, %189 : vector<2x32xf32>
    %cst_46 = arith.constant 0.000000e+00 : f32
    %191 = vector.broadcast %cst_46 : f32 to vector<2x32xf32>
    %192 = arith.maximumf %190, %191 : vector<2x32xf32>
    %c0_47 = arith.constant 0 : index
    %c0_48 = arith.constant 0 : index
    %193 = vector.load %arg6[%c0_47, %c0_48] : memref<32x8xf32, #tpu.memory_space<vmem>>, vector<32x8xf32>
    %cst_49 = arith.constant dense<0.000000e+00> : vector<2x8xf32>
    %194 = tpu.matmul %192, %193, %cst_49 {dimension_numbers = #tpu.dot_dimension_numbers<[1], [0], [0], [1], [0, 0, 1, 1], [], []>} : vector<2x32xf32>, vector<32x8xf32>, vector<2x8xf32> -> vector<2x8xf32>
    %c0_50 = arith.constant 0 : index
    %c0_51 = arith.constant 0 : index
    %195 = vector.load %arg7[%c0_50, %c0_51] : memref<1x8xf32, #tpu.memory_space<vmem>>, vector<1x8xf32>
    %196 = vector.broadcast %195 : vector<1x8xf32> to vector<2x8xf32>
    %197 = arith.addf %194, %196 : vector<2x8xf32>
    %c0_52 = arith.constant 0 : index
    %c0_53 = arith.constant 0 : index
    %198 = vector.load %arg8[%c0_52, %c0_53] : memref<2x8xf32, #tpu.memory_space<vmem>>, vector<2x8xf32>
    tpu.vector_store %arg8[%c0_52, %c0_53], %197 {strides = array<i32>} : memref<2x8xf32, #tpu.memory_space<vmem>>, vector<2x8xf32>,
    return
  }
}

</mosaic_0001>

<llo_original>
// kernel: tpu_custom_call.1
$region0: #{tpu_custom_call.1}
  #allocation0 [shape = 'u32[]', space=smem, size = 0x4, offset = 0x4, fixed_abs, tag = 'smem constant byte address 0x4 - core index']
  #allocation1 [shape = 'u32[72,128]{1,0:T(1,128)}', space=vmem, size = 0x9000, scoped, tag = 'internal scratch']
  %s0 = inlined_call_operand.hbm [shape: f32[16,16], index: 0, kind: input, shape index: {}]
  %s1 = inlined_call_operand.hbm [shape: f32[16,128], index: 1, kind: input, shape index: {}]
  %s2 = inlined_call_operand.vmem [shape: f32[32,128], index: 2, kind: input, shape index: {}]
  %s3 = inlined_call_operand.vmem [shape: f32[1,128], index: 3, kind: input, shape index: {}]
  %s4 = inlined_call_operand.hbm [shape: f32[32,32], index: 4, kind: input, shape index: {}]
  %s5 = inlined_call_operand.vmem [shape: f32[1,32], index: 5, kind: input, shape index: {}]
  %s6 = inlined_call_operand.vmem [shape: f32[32,8], index: 6, kind: input, shape index: {}]
  %s7 = inlined_call_operand.vmem [shape: f32[1,8], index: 7, kind: input, shape index: {}]
  %s8 = inlined_call_operand.hbm [shape: f32[2,8], index: 8, kind: output, shape index: {}]
  %s9 = sld [smem:[#allocation0]]
  $region54: #{tpu_custom_call.1} parent=0
    _
  %s11 = ssub.s32 1, %s9
  %s12 = scalar_select 0, %s11, %s9
  $region1: #{tpu_custom_call.1} parent=0
    #allocation2 [shape = 'u8[8192]{0}', space=vmem, size = 0x2000, scoped, tag = 'input window, operand 0, single buffered']
    #allocation3 [shape = 's32[1]{0}', space=sflag, size = 0x4, scoped, tag = 'scoped memory for tpu_custom_call.1']
    #allocation4 [shape = 's32[1]{0}', space=sflag, size = 0x4, scoped, tag = 'scoped memory for tpu_custom_call.1']
    #allocation5 [shape = 'u8[8192]{0}', space=vmem, size = 0x2000, scoped, tag = 'input window, operand 1, single buffered']
    #allocation6 [shape = 's32[1]{0}', space=sflag, size = 0x4, scoped, tag = 'scoped memory for tpu_custom_call.1']
    #allocation7 [shape = 'u8[16384]{0}', space=vmem, size = 0x4000, scoped, tag = 'input window, operand 4, single buffered']
    #allocation8 [shape = 'u8[1024]{0}', space=vmem, size = 0x400, scoped, tag = 'output window, operand 0, single buffered']
    %13 = vsyncpa [#allocation3], 0
    %14 = vsyncpa [#allocation6], 0
    %15 = vsyncpa [#allocation4], 0
    // Predicated region
    $region2: #{tpu_custom_call.1} parent=1 // pred_check
      _
    $region3: #{tpu_custom_call.1} parent=1 // pred_check_branch
      %17 = sbr.rel (0) target = $region5
    $region4: #{tpu_custom_call.1} parent=1 // pred_region
      %19 = vsyncadd [#allocation3], 0
      %s20 = sshll.u32 %s0, 4
      %s21 = int_to_ptr.hbm [resolvable:$true] %s20
      %s22 = sshll.u32 [#allocation2], 4
      %s23 = int_to_ptr.vmem [resolvable:$true] %s22
      %28 = dma.hbm_to_vmem [thread:$0]  %s21, 256, %s23, [#allocation3], 128, 128, 8
    $region5: #{tpu_custom_call.1} parent=1 // pred_fallthru
      _
    // Predicated region
    $region6: #{tpu_custom_call.1} parent=1 // pred_check
      _
    $region7: #{tpu_custom_call.1} parent=1 // pred_check_branch
      %30 = sbr.rel (0) target = $region9
    $region8: #{tpu_custom_call.1} parent=1 // pred_region
      %32 = vsyncadd [#allocation6], 0
      %s33 = sshll.u32 %s1, 4
      %s34 = int_to_ptr.hbm [resolvable:$true] %s33
      %s35 = sshll.u32 [#allocation5], 4
      %s36 = int_to_ptr.vmem [resolvable:$true] %s35
      %41 = dma.hbm_to_vmem [thread:$0]  %s34, 256, %s36, [#allocation6], 128, 128, 8
    $region9: #{tpu_custom_call.1} parent=1 // pred_fallthru
      _
    // Predicated region
    $region10: #{tpu_custom_call.1} parent=1 // pred_check
      _
    $region11: #{tpu_custom_call.1} parent=1 // pred_check_branch
      %43 = sbr.rel (0) target = $region13
    $region12: #{tpu_custom_call.1} parent=1 // pred_region
      _
    $region13: #{tpu_custom_call.1} parent=1 // pred_fallthru
      _
    // Predicated region
    $region14: #{tpu_custom_call.1} parent=1 // pred_check
      _
    $region15: #{tpu_custom_call.1} parent=1 // pred_check_branch
      %45 = sbr.rel (0) target = $region17
    $region16: #{tpu_custom_call.1} parent=1 // pred_region
      _
    $region17: #{tpu_custom_call.1} parent=1 // pred_fallthru
      _
    // Predicated region
    $region18: #{tpu_custom_call.1} parent=1 // pred_check
      _
    $region19: #{tpu_custom_call.1} parent=1 // pred_check_branch
      %47 = sbr.rel (0) target = $region21
    $region20: #{tpu_custom_call.1} parent=1 // pred_region
      %49 = vsyncadd [#allocation6], 0
      %s50 = sshll.u32 %s4, 4
      %s51 = int_to_ptr.hbm [resolvable:$true] %s50
      %s52 = sshll.u32 [#allocation7], 4
      %s53 = int_to_ptr.vmem [resolvable:$true] %s52
      %58 = dma.hbm_to_vmem [thread:$0]  %s51, 512, %s53, [#allocation6], 128, 128, 8
    $region21: #{tpu_custom_call.1} parent=1 // pred_fallthru
      _
    // Predicated region
    $region22: #{tpu_custom_call.1} parent=1 // pred_check
      _
    $region23: #{tpu_custom_call.1} parent=1 // pred_check_branch
      %60 = sbr.rel (0) target = $region25
    $region24: #{tpu_custom_call.1} parent=1 // pred_region
      _
    $region25: #{tpu_custom_call.1} parent=1 // pred_fallthru
      _
    // Predicated region
    $region26: #{tpu_custom_call.1} parent=1 // pred_check
      _
    $region27: #{tpu_custom_call.1} parent=1 // pred_check_branch
      %62 = sbr.rel (0) target = $region29
    $region28: #{tpu_custom_call.1} parent=1 // pred_region
      _
    $region29: #{tpu_custom_call.1} parent=1 // pred_fallthru
      _
    // Predicated region
    $region30: #{tpu_custom_call.1} parent=1 // pred_check
      _
    $region31: #{tpu_custom_call.1} parent=1 // pred_check_branch
      %64 = sbr.rel (0) target = $region33
    $region32: #{tpu_custom_call.1} parent=1 // pred_region
      _
    $region33: #{tpu_custom_call.1} parent=1 // pred_fallthru
      _
    // Predicated region
    $region34: #{tpu_custom_call.1} parent=1 // pred_check
      _
    $region35: #{tpu_custom_call.1} parent=1 // pred_check_branch
      %66 = sbr.rel (0) target = $region37
    $region36: #{tpu_custom_call.1} parent=1 // pred_region
      %68 = dma.done [#allocation3], 256
    $region37: #{tpu_custom_call.1} parent=1 // pred_fallthru
      _
    // Predicated region
    $region38: #{tpu_custom_call.1} parent=1 // pred_check
      _
    $region39: #{tpu_custom_call.1} parent=1 // pred_check_branch
      %70 = sbr.rel (0) target = $region41
    $region40: #{tpu_custom_call.1} parent=1 // pred_region
      %72 = dma.done [#allocation6], 256
    $region41: #{tpu_custom_call.1} parent=1 // pred_fallthru
      _
    // Predicated region
    $region42: #{tpu_custom_call.1} parent=1 // pred_check
      _
    $region43: #{tpu_custom_call.1} parent=1 // pred_check_branch
      %74 = sbr.rel (0) target = $region45
    $region44: #{tpu_custom_call.1} parent=1 // pred_region
      %76 = dma.done [#allocation6], 512
    $region45: #{tpu_custom_call.1} parent=1 // pred_fallthru
      _
    %v77 = vld [vmem:[#allocation2] sm:$0xff]
    %v78 = vld [vmem:[#allocation2 + $0x8] sm:$0xff]
    %v79 = vld [vmem:[#allocation5] sm:$0xff]
    %v80 = vld [vmem:[#allocation5 + $0x8] sm:$0xff]
    %v81 = vld [vmem:[%s3] sm:$0x1]
    %v83 = vperm.slane %v81, 0
    %vm85 = vcmask 130048
    %v87 = vsel %vm85, %v77, 0
    %v90 = vsel %vm85, %v78, 0
    %92 = vmatpush.msra.mxu0 0.0
    %93 = vmatpush.msra.mxu0 0.0
    %94 = vmatpush.msra.mxu0 0.0
    %95 = vmatpush.msra.mxu0 0.0
    %96 = vmatpush.msra.mxu0 0.0
    %97 = vmatpush.msra.mxu0 0.0
    %98 = vmatpush.msra.mxu0 0.0
    %99 = vmatpush.msra.mxu0 0.0
    %100 = vmatpush.msra.mxu0 0.0
    %101 = vmatpush.msra.mxu0 0.0
    %102 = vmatpush.msra.mxu0 0.0
    %103 = vmatpush.msra.mxu0 0.0
    %104 = vmatpush.msra.mxu0 0.0
    %105 = vmatpush.msra.mxu0 0.0
    %106 = vmatpush.msra.mxu0 %v80
    %107 = vmatpush.msra.mxu0 %v79
    %108 = vmatmul.f32.gmra.mxu0 %v87
    %v109 = vpop.f32.mrf.mxu0
    %v110 = vadd.f32 %v83, %v109
    %111 = vmatmul.f32.gmra.mxu0 %v90
    %v112 = vpop.f32.mrf.mxu0
    %v113 = vadd.f32 %v83, %v112
    %114 = vdwg.mxu0
    %v115 = vld [vmem:[%s2] sm:$0xff]
    %v116 = vld [vmem:[%s2 + $0x8] sm:$0xff]
    %v117 = vld [vmem:[%s2 + $0x10] sm:$0xff]
    %v118 = vld [vmem:[%s2 + $0x18] sm:$0xff]
    %vm119 = vcmask 261120
    %v121 = vsel %vm119, 0.0, 0
    %123 = vmatpush.msra.mxu0 0.0
    %124 = vmatpush.msra.mxu0 0.0
    %125 = vmatpush.msra.mxu0 0.0
    %126 = vmatpush.msra.mxu0 0.0
    %127 = vmatpush.msra.mxu0 0.0
    %128 = vmatpush.msra.mxu0 0.0
    %129 = vmatpush.msra.mxu0 0.0
    %130 = vmatpush.msra.mxu0 0.0
    %131 = vmatpush.msra.mxu0 0.0
    %132 = vmatpush.msra.mxu0 0.0
    %133 = vmatpush.msra.mxu0 0.0
    %134 = vmatpush.msra.mxu0 0.0
    %135 = vmatpush.msra.mxu0 %v118
    %136 = vmatpush.msra.mxu0 %v117
    %137 = vmatpush.msra.mxu0 %v116
    %138 = vmatpush.msra.mxu0 %v115
    %139 = vmatmul.f32.gmra.mxu0 %v121
    %v140 = vpop.f32.mrf.mxu0
    %v141 = vadd.f32 0.0, %v140
    %142 = vdwg.mxu0
    %v144 = vrot.slane %v141, 1
    %v147 = vadd.f32 %v110, %v141
    %v148 = vadd.f32 %v113, %v144
    %v149 = vxor.u32 %v147, 2147483648
    %v150 = vxor.u32 %v148, 2147483648
    %v151 = vmul.f32 %v149, 1.442695
    %v152 = vpow.pop %v151
    %v153 = vmul.f32 %v150, 1.442695
    %v154 = vpow.pop %v153
    %v155 = vadd.f32 %v152, 1.0
    %v156 = vadd.f32 %v154, 1.0
    %v157 = vrcp.pop %v155
    %v158 = vmul.f32 %v155, %v157
    %v159 = vsub.f32 1.0, %v158
    %v160 = vmul.f32 %v157, %v159
    %v161 = vadd.f32 %v157, %v160
    %vm162 = vweird.f32 %v155
    %vm163 = vweird.f32 %v157
    %vm164 = vmor %vm162, %vm163
    %v165 = vsel %vm164, %v157, %v161
    %v166 = vand.u32 2147483647, %v155
    %vm167 = vcmp.eq.f32.partialorder %v166, 8.507059e+37
    %v168 = vand.u32 %v155, 2147483648
    %v169 = vor.u32 1.1754944e-38, %v168
    %v170 = vsel %vm167, %v169, %v165
    %v171 = vmul.f32 1.0, %v170
    %v172 = vrcp.pop %v156
    %v173 = vmul.f32 %v156, %v172
    %v174 = vsub.f32 1.0, %v173
    %v175 = vmul.f32 %v172, %v174
    %v176 = vadd.f32 %v172, %v175
    %vm177 = vweird.f32 %v156
    %vm178 = vweird.f32 %v172
    %vm179 = vmor %vm177, %vm178
    %v180 = vsel %vm179, %v172, %v176
    %v181 = vand.u32 2147483647, %v156
    %vm182 = vcmp.eq.f32.partialorder %v181, 8.507059e+37
    %v183 = vand.u32 %v156, 2147483648
    %v184 = vor.u32 1.1754944e-38, %v183
    %v185 = vsel %vm182, %v184, %v180
    %v186 = vmul.f32 1.0, %v185
    %v187 = vmul.f32 %v171, 2.0
    %v188 = vmul.f32 %v186, 2.0
    %v189 = vsub.f32 %v187, 1.0
    %v190 = vsub.f32 %v188, 1.0
    %v191 = vmul.f32 %v171, 0.0
    %v192 = vmul.f32 %v186, 0.0
    %195 = vrot.lane.b32.xlu0 %v189, 32
    %v196 = vpop.permute.xlu0 %195
    %197 = vrot.lane.b32.xlu0 %v190, 32
    %v198 = vpop.permute.xlu0 %197
    %v201 = vmul.f32 %v171, %v196
    %v202 = vmul.f32 %v186, %v198
    %205 = vrot.lane.b32.xlu0 %v201, 32
    %v206 = vpop.permute.xlu0 %205
    %207 = vrot.lane.b32.xlu0 %v202, 32
    %v208 = vpop.permute.xlu0 %207
    %v211 = vadd.f32 %v191, %v206
    %v212 = vadd.f32 %v192, %v208
    %v213 = vtanh.pop %v211
    %v214 = vtanh.pop %v212
    %217 = vrot.lane.b32.xlu0 %v213, 32
    %v218 = vpop.permute.xlu0 %217
    %219 = vrot.lane.b32.xlu0 %v214, 32
    %v220 = vpop.permute.xlu0 %219
    %v223 = vmul.f32 %v171, %v218
    %v224 = vmul.f32 %v186, %v220
    %v227 = vrot.slane %v224, 7
    %vm228 = vcmask 1041409
    %v229 = vsel %vm228, %v227, %v223
    %230 = vrot.lane.b32.xlu0 %v229, 64
    %v231 = vpop.permute.xlu0 %230
    %v232 = vsel %vm119, %v231, 0
    %234 = vmatpush.msra.mxu0 0.0
    %235 = vmatpush.msra.mxu0 0.0
    %236 = vmatpush.msra.mxu0 0.0
    %237 = vmatpush.msra.mxu0 0.0
    %238 = vmatpush.msra.mxu0 0.0
    %239 = vmatpush.msra.mxu0 0.0
    %240 = vmatpush.msra.mxu0 0.0
    %241 = vmatpush.msra.mxu0 0.0
    %242 = vmatpush.msra.mxu0 0.0
    %243 = vmatpush.msra.mxu0 0.0
    %244 = vmatpush.msra.mxu0 0.0
    %245 = vmatpush.msra.mxu0 0.0
    %246 = vmatpush.msra.mxu0 %v118
    %247 = vmatpush.msra.mxu0 %v117
    %248 = vmatpush.msra.mxu0 %v116
    %249 = vmatpush.msra.mxu0 %v115
    %250 = vmatmul.f32.gmra.mxu0 %v232
    %v251 = vpop.f32.mrf.mxu0
    %v252 = vadd.f32 0.0, %v251
    %253 = vdwg.mxu0
    %v255 = vrot.slane %v252, 7
    %v258 = vadd.f32 %v110, %v255
    %v259 = vadd.f32 %v113, %v252
    %v260 = vxor.u32 %v258, 2147483648
    %v261 = vxor.u32 %v259, 2147483648
    %v262 = vmul.f32 %v260, 1.442695
    %v263 = vpow.pop %v262
    %v264 = vmul.f32 %v261, 1.442695
    %v265 = vpow.pop %v264
    %v266 = vadd.f32 %v263, 1.0
    %v267 = vadd.f32 %v265, 1.0
    %v268 = vrcp.pop %v266
    %v269 = vmul.f32 %v266, %v268
    %v270 = vsub.f32 1.0, %v269
    %v271 = vmul.f32 %v268, %v270
    %v272 = vadd.f32 %v268, %v271
    %vm273 = vweird.f32 %v266
    %vm274 = vweird.f32 %v268
    %vm275 = vmor %vm273, %vm274
    %v276 = vsel %vm275, %v268, %v272
    %v277 = vand.u32 2147483647, %v266
    %vm278 = vcmp.eq.f32.partialorder %v277, 8.507059e+37
    %v279 = vand.u32 %v266, 2147483648
    %v280 = vor.u32 1.1754944e-38, %v279
    %v281 = vsel %vm278, %v280, %v276
    %v282 = vmul.f32 1.0, %v281
    %v283 = vrcp.pop %v267
    %v284 = vmul.f32 %v267, %v283
    %v285 = vsub.f32 1.0, %v284
    %v286 = vmul.f32 %v283, %v285
    %v287 = vadd.f32 %v283, %v286
    %vm288 = vweird.f32 %v267
    %vm289 = vweird.f32 %v283
    %vm290 = vmor %vm288, %vm289
    %v291 = vsel %vm290, %v283, %v287
    %v292 = vand.u32 2147483647, %v267
    %vm293 = vcmp.eq.f32.partialorder %v292, 8.507059e+37
    %v294 = vand.u32 %v267, 2147483648
    %v295 = vor.u32 1.1754944e-38, %v294
    %v296 = vsel %vm293, %v295, %v291
    %v297 = vmul.f32 1.0, %v296
    %v298 = vmul.f32 %v282, 2.0
    %v299 = vmul.f32 %v297, 2.0
    %v300 = vsub.f32 %v298, 1.0
    %v301 = vsub.f32 %v299, 1.0
    %v304 = vrot.slane %v211, 7
    %v305 = vrot.slane %v212, 7
    %v308 = vmul.f32 %v282, %v304
    %v309 = vmul.f32 %v297, %v305
    %312 = vrot.lane.b32.xlu0 %v300, 32
    %v313 = vpop.permute.xlu0 %312
    %314 = vrot.lane.b32.xlu0 %v301, 32
    %v315 = vpop.permute.xlu0 %314
    %v318 = vmul.f32 %v282, %v313
    %v319 = vmul.f32 %v297, %v315
    %322 = vrot.lane.b32.xlu0 %v318, 32
    %v323 = vpop.permute.xlu0 %322
    %324 = vrot.lane.b32.xlu0 %v319, 32
    %v325 = vpop.permute.xlu0 %324
    %v328 = vadd.f32 %v308, %v323
    %v329 = vadd.f32 %v309, %v325
    %v330 = vtanh.pop %v328
    %v331 = vtanh.pop %v329
    %334 = vrot.lane.b32.xlu0 %v330, 32
    %v335 = vpop.permute.xlu0 %334
    %336 = vrot.lane.b32.xlu0 %v331, 32
    %v337 = vpop.permute.xlu0 %336
    %v340 = vmul.f32 %v282, %v335
    %v341 = vmul.f32 %v297, %v337
    %v344 = vrot.slane %v340, 1
    %v345 = vsel %vm228, %v341, %v344
    %346 = vrot.lane.b32.xlu0 %v345, 64
    %v347 = vpop.permute.xlu0 %346
    %v348 = vsel %vm119, %v347, 0
    %350 = vmatpush.msra.mxu0 0.0
    %351 = vmatpush.msra.mxu0 0.0
    %352 = vmatpush.msra.mxu0 0.0
    %353 = vmatpush.msra.mxu0 0.0
    %354 = vmatpush.msra.mxu0 0.0
    %355 = vmatpush.msra.mxu0 0.0
    %356 = vmatpush.msra.mxu0 0.0
    %357 = vmatpush.msra.mxu0 0.0
    %358 = vmatpush.msra.mxu0 0.0
    %359 = vmatpush.msra.mxu0 0.0
    %360 = vmatpush.msra.mxu0 0.0
    %361 = vmatpush.msra.mxu0 0.0
    %362 = vmatpush.msra.mxu0 %v118
    %363 = vmatpush.msra.mxu0 %v117
    %364 = vmatpush.msra.mxu0 %v116
    %365 = vmatpush.msra.mxu0 %v115
    %366 = vmatmul.f32.gmra.mxu0 %v348
    %v367 = vpop.f32.mrf.mxu0
    %v368 = vadd.f32 0.0, %v367
    %369 = vdwg.mxu0
    %v371 = vrot.slane %v368, 6
    %v372 = vrot.slane %v368, 7
    %v375 = vadd.f32 %v110, %v371
    %v376 = vadd.f32 %v113, %v372
    %v377 = vxor.u32 %v375, 2147483648
    %v378 = vxor.u32 %v376, 2147483648
    %v379 = vmul.f32 %v377, 1.442695
    %v380 = vpow.pop %v379
    %v381 = vmul.f32 %v378, 1.442695
    %v382 = vpow.pop %v381
    %v383 = vadd.f32 %v380, 1.0
    %v384 = vadd.f32 %v382, 1.0
    %v385 = vrcp.pop %v383
    %v386 = vmul.f32 %v383, %v385
    %v387 = vsub.f32 1.0, %v386
    %v388 = vmul.f32 %v385, %v387
    %v389 = vadd.f32 %v385, %v388
    %vm390 = vweird.f32 %v383
    %vm391 = vweird.f32 %v385
    %vm392 = vmor %vm390, %vm391
    %v393 = vsel %vm392, %v385, %v389
    %v394 = vand.u32 2147483647, %v383
    %vm395 = vcmp.eq.f32.partialorder %v394, 8.507059e+37
    %v396 = vand.u32 %v383, 2147483648
    %v397 = vor.u32 1.1754944e-38, %v396
    %v398 = vsel %vm395, %v397, %v393
    %v399 = vmul.f32 1.0, %v398
    %v400 = vrcp.pop %v384
    %v401 = vmul.f32 %v384, %v400
    %v402 = vsub.f32 1.0, %v401
    %v403 = vmul.f32 %v400, %v402
    %v404 = vadd.f32 %v400, %v403
    %vm405 = vweird.f32 %v384
    %vm406 = vweird.f32 %v400
    %vm407 = vmor %vm405, %vm406
    %v408 = vsel %vm407, %v400, %v404
    %v409 = vand.u32 2147483647, %v384
    %vm410 = vcmp.eq.f32.partialorder %v409, 8.507059e+37
    %v411 = vand.u32 %v384, 2147483648
    %v412 = vor.u32 1.1754944e-38, %v411
    %v413 = vsel %vm410, %v412, %v408
    %v414 = vmul.f32 1.0, %v413
    %v415 = vmul.f32 %v399, 2.0
    %v416 = vmul.f32 %v414, 2.0
    %v417 = vsub.f32 %v415, 1.0
    %v418 = vsub.f32 %v416, 1.0
    %v421 = vrot.slane %v328, 7
    %v422 = vrot.slane %v329, 7
    %v425 = vmul.f32 %v399, %v421
    %v426 = vmul.f32 %v414, %v422
    %429 = vrot.lane.b32.xlu0 %v417, 32
    %v430 = vpop.permute.xlu0 %429
    %431 = vrot.lane.b32.xlu0 %v418, 32
    %v432 = vpop.permute.xlu0 %431
    %v435 = vmul.f32 %v399, %v430
    %v436 = vmul.f32 %v414, %v432
    %439 = vrot.lane.b32.xlu0 %v435, 32
    %v440 = vpop.permute.xlu0 %439
    %441 = vrot.lane.b32.xlu0 %v436, 32
    %v442 = vpop.permute.xlu0 %441
    %v445 = vadd.f32 %v425, %v440
    %v446 = vadd.f32 %v426, %v442
    %v447 = vtanh.pop %v445
    %v448 = vtanh.pop %v446
    %451 = vrot.lane.b32.xlu0 %v447, 32
    %v452 = vpop.permute.xlu0 %451
    %453 = vrot.lane.b32.xlu0 %v448, 32
    %v454 = vpop.permute.xlu0 %453
    %v457 = vmul.f32 %v399, %v452
    %v458 = vmul.f32 %v414, %v454
    %v461 = vrot.slane %v457, 2
    %v462 = vrot.slane %v458, 1
    %v463 = vsel %vm228, %v462, %v461
    %464 = vrot.lane.b32.xlu0 %v463, 64
    %v465 = vpop.permute.xlu0 %464
    %v466 = vsel %vm119, %v465, 0
    %468 = vmatpush.msra.mxu0 0.0
    %469 = vmatpush.msra.mxu0 0.0
    %470 = vmatpush.msra.mxu0 0.0
    %471 = vmatpush.msra.mxu0 0.0
    %472 = vmatpush.msra.mxu0 0.0
    %473 = vmatpush.msra.mxu0 0.0
    %474 = vmatpush.msra.mxu0 0.0
    %475 = vmatpush.msra.mxu0 0.0
    %476 = vmatpush.msra.mxu0 0.0
    %477 = vmatpush.msra.mxu0 0.0
    %478 = vmatpush.msra.mxu0 0.0
    %479 = vmatpush.msra.mxu0 0.0
    %480 = vmatpush.msra.mxu0 %v118
    %481 = vmatpush.msra.mxu0 %v117
    %482 = vmatpush.msra.mxu0 %v116
    %483 = vmatpush.msra.mxu0 %v115
    %484 = vmatmul.f32.gmra.mxu0 %v466
    %v485 = vpop.f32.mrf.mxu0
    %v486 = vadd.f32 0.0, %v485
    %487 = vdwg.mxu0
    %v489 = vrot.slane %v486, 5
    %v490 = vrot.slane %v486, 6
    %v493 = vadd.f32 %v110, %v489
    %v494 = vadd.f32 %v113, %v490
    %v495 = vxor.u32 %v493, 2147483648
    %v496 = vxor.u32 %v494, 2147483648
    %v497 = vmul.f32 %v495, 1.442695
    %v498 = vpow.pop %v497
    %v499 = vmul.f32 %v496, 1.442695
    %v500 = vpow.pop %v499
    %v501 = vadd.f32 %v498, 1.0
    %v502 = vadd.f32 %v500, 1.0
    %v503 = vrcp.pop %v501
    %v504 = vmul.f32 %v501, %v503
    %v505 = vsub.f32 1.0, %v504
    %v506 = vmul.f32 %v503, %v505
    %v507 = vadd.f32 %v503, %v506
    %vm508 = vweird.f32 %v501
    %vm509 = vweird.f32 %v503
    %vm510 = vmor %vm508, %vm509
    %v511 = vsel %vm510, %v503, %v507
    %v512 = vand.u32 2147483647, %v501
    %vm513 = vcmp.eq.f32.partialorder %v512, 8.507059e+37
    %v514 = vand.u32 %v501, 2147483648
    %v515 = vor.u32 1.1754944e-38, %v514
    %v516 = vsel %vm513, %v515, %v511
    %v517 = vmul.f32 1.0, %v516
    %v518 = vrcp.pop %v502
    %v519 = vmul.f32 %v502, %v518
    %v520 = vsub.f32 1.0, %v519
    %v521 = vmul.f32 %v518, %v520
    %v522 = vadd.f32 %v518, %v521
    %vm523 = vweird.f32 %v502
    %vm524 = vweird.f32 %v518
    %vm525 = vmor %vm523, %vm524
    %v526 = vsel %vm525, %v518, %v522
    %v527 = vand.u32 2147483647, %v502
    %vm528 = vcmp.eq.f32.partialorder %v527, 8.507059e+37
    %v529 = vand.u32 %v502, 2147483648
    %v530 = vor.u32 1.1754944e-38, %v529
    %v531 = vsel %vm528, %v530, %v526
    %v532 = vmul.f32 1.0, %v531
    %v533 = vmul.f32 %v517, 2.0
    %v534 = vmul.f32 %v532, 2.0
    %v535 = vsub.f32 %v533, 1.0
    %v536 = vsub.f32 %v534, 1.0
    %v539 = vrot.slane %v445, 7
    %v540 = vrot.slane %v446, 7
    %v543 = vmul.f32 %v517, %v539
    %v544 = vmul.f32 %v532, %v540
    %547 = vrot.lane.b32.xlu0 %v535, 32
    %v548 = vpop.permute.xlu0 %547
    %549 = vrot.lane.b32.xlu0 %v536, 32
    %v550 = vpop.permute.xlu0 %549
    %v553 = vmul.f32 %v517, %v548
    %v554 = vmul.f32 %v532, %v550
    %557 = vrot.lane.b32.xlu0 %v553, 32
    %v558 = vpop.permute.xlu0 %557
    %559 = vrot.lane.b32.xlu0 %v554, 32
    %v560 = vpop.permute.xlu0 %559
    %v563 = vadd.f32 %v543, %v558
    %v564 = vadd.f32 %v544, %v560
    %v565 = vtanh.pop %v563
    %v566 = vtanh.pop %v564
    %569 = vrot.lane.b32.xlu0 %v565, 32
    %v570 = vpop.permute.xlu0 %569
    %571 = vrot.lane.b32.xlu0 %v566, 32
    %v572 = vpop.permute.xlu0 %571
    %v575 = vmul.f32 %v517, %v570
    %v576 = vmul.f32 %v532, %v572
    %v579 = vrot.slane %v575, 3
    %v580 = vrot.slane %v576, 2
    %v581 = vsel %vm228, %v580, %v579
    %582 = vrot.lane.b32.xlu0 %v581, 64
    %v583 = vpop.permute.xlu0 %582
    %v584 = vsel %vm119, %v583, 0
    %586 = vmatpush.msra.mxu0 0.0
    %587 = vmatpush.msra.mxu0 0.0
    %588 = vmatpush.msra.mxu0 0.0
    %589 = vmatpush.msra.mxu0 0.0
    %590 = vmatpush.msra.mxu0 0.0
    %591 = vmatpush.msra.mxu0 0.0
    %592 = vmatpush.msra.mxu0 0.0
    %593 = vmatpush.msra.mxu0 0.0
    %594 = vmatpush.msra.mxu0 0.0
    %595 = vmatpush.msra.mxu0 0.0
    %596 = vmatpush.msra.mxu0 0.0
    %597 = vmatpush.msra.mxu0 0.0
    %598 = vmatpush.msra.mxu0 %v118
    %599 = vmatpush.msra.mxu0 %v117
    %600 = vmatpush.msra.mxu0 %v116
    %601 = vmatpush.msra.mxu0 %v115
    %602 = vmatmul.f32.gmra.mxu0 %v584
    %v603 = vpop.f32.mrf.mxu0
    %v604 = vadd.f32 0.0, %v603
    %605 = vdwg.mxu0
    %v607 = vrot.slane %v604, 4
    %v608 = vrot.slane %v604, 5
    %v611 = vadd.f32 %v110, %v607
    %v612 = vadd.f32 %v113, %v608
    %v613 = vxor.u32 %v611, 2147483648
    %v614 = vxor.u32 %v612, 2147483648
    %v615 = vmul.f32 %v613, 1.442695
    %v616 = vpow.pop %v615
    %v617 = vmul.f32 %v614, 1.442695
    %v618 = vpow.pop %v617
    %v619 = vadd.f32 %v616, 1.0
    %v620 = vadd.f32 %v618, 1.0
    %v621 = vrcp.pop %v619
    %v622 = vmul.f32 %v619, %v621
    %v623 = vsub.f32 1.0, %v622
    %v624 = vmul.f32 %v621, %v623
    %v625 = vadd.f32 %v621, %v624
    %vm626 = vweird.f32 %v619
    %vm627 = vweird.f32 %v621
    %vm628 = vmor %vm626, %vm627
    %v629 = vsel %vm628, %v621, %v625
    %v630 = vand.u32 2147483647, %v619
    %vm631 = vcmp.eq.f32.partialorder %v630, 8.507059e+37
    %v632 = vand.u32 %v619, 2147483648
    %v633 = vor.u32 1.1754944e-38, %v632
    %v634 = vsel %vm631, %v633, %v629
    %v635 = vmul.f32 1.0, %v634
    %v636 = vrcp.pop %v620
    %v637 = vmul.f32 %v620, %v636
    %v638 = vsub.f32 1.0, %v637
    %v639 = vmul.f32 %v636, %v638
    %v640 = vadd.f32 %v636, %v639
    %vm641 = vweird.f32 %v620
    %vm642 = vweird.f32 %v636
    %vm643 = vmor %vm641, %vm642
    %v644 = vsel %vm643, %v636, %v640
    %v645 = vand.u32 2147483647, %v620
    %vm646 = vcmp.eq.f32.partialorder %v645, 8.507059e+37
    %v647 = vand.u32 %v620, 2147483648
    %v648 = vor.u32 1.1754944e-38, %v647
    %v649 = vsel %vm646, %v648, %v644
    %v650 = vmul.f32 1.0, %v649
    %v651 = vmul.f32 %v635, 2.0
    %v652 = vmul.f32 %v650, 2.0
    %v653 = vsub.f32 %v651, 1.0
    %v654 = vsub.f32 %v652, 1.0
    %v657 = vrot.slane %v563, 7
    %v658 = vrot.slane %v564, 7
    %v661 = vmul.f32 %v635, %v657
    %v662 = vmul.f32 %v650, %v658
    %665 = vrot.lane.b32.xlu0 %v653, 32
    %v666 = vpop.permute.xlu0 %665
    %667 = vrot.lane.b32.xlu0 %v654, 32
    %v668 = vpop.permute.xlu0 %667
    %v671 = vmul.f32 %v635, %v666
    %v672 = vmul.f32 %v650, %v668
    %675 = vrot.lane.b32.xlu0 %v671, 32
    %v676 = vpop.permute.xlu0 %675
    %677 = vrot.lane.b32.xlu0 %v672, 32
    %v678 = vpop.permute.xlu0 %677
    %v681 = vadd.f32 %v661, %v676
    %v682 = vadd.f32 %v662, %v678
    %v683 = vtanh.pop %v681
    %v684 = vtanh.pop %v682
    %687 = vrot.lane.b32.xlu0 %v683, 32
    %v688 = vpop.permute.xlu0 %687
    %689 = vrot.lane.b32.xlu0 %v684, 32
    %v690 = vpop.permute.xlu0 %689
    %v693 = vmul.f32 %v635, %v688
    %v694 = vmul.f32 %v650, %v690
    %v697 = vrot.slane %v693, 4
    %v698 = vrot.slane %v694, 3
    %v699 = vsel %vm228, %v698, %v697
    %700 = vrot.lane.b32.xlu0 %v699, 64
    %v701 = vpop.permute.xlu0 %700
    %v702 = vsel %vm119, %v701, 0
    %704 = vmatpush.msra.mxu0 0.0
    %705 = vmatpush.msra.mxu0 0.0
    %706 = vmatpush.msra.mxu0 0.0
    %707 = vmatpush.msra.mxu0 0.0
    %708 = vmatpush.msra.mxu0 0.0
    %709 = vmatpush.msra.mxu0 0.0
    %710 = vmatpush.msra.mxu0 0.0
    %711 = vmatpush.msra.mxu0 0.0
    %712 = vmatpush.msra.mxu0 0.0
    %713 = vmatpush.msra.mxu0 0.0
    %714 = vmatpush.msra.mxu0 0.0
    %715 = vmatpush.msra.mxu0 0.0
    %716 = vmatpush.msra.mxu0 %v118
    %717 = vmatpush.msra.mxu0 %v117
    %718 = vmatpush.msra.mxu0 %v116
    %719 = vmatpush.msra.mxu0 %v115
    %720 = vmatmul.f32.gmra.mxu0 %v702
    %v721 = vpop.f32.mrf.mxu0
    %v722 = vadd.f32 0.0, %v721
    %723 = vdwg.mxu0
    %v725 = vrot.slane %v722, 3
    %v726 = vrot.slane %v722, 4
    %v729 = vadd.f32 %v110, %v725
    %v730 = vadd.f32 %v113, %v726
    %v731 = vxor.u32 %v729, 2147483648
    %v732 = vxor.u32 %v730, 2147483648
    %v733 = vmul.f32 %v731, 1.442695
    %v734 = vpow.pop %v733
    %v735 = vmul.f32 %v732, 1.442695
    %v736 = vpow.pop %v735
    %v737 = vadd.f32 %v734, 1.0
    %v738 = vadd.f32 %v736, 1.0
    %v739 = vrcp.pop %v737
    %v740 = vmul.f32 %v737, %v739
    %v741 = vsub.f32 1.0, %v740
    %v742 = vmul.f32 %v739, %v741
    %v743 = vadd.f32 %v739, %v742
    %vm744 = vweird.f32 %v737
    %vm745 = vweird.f32 %v739
    %vm746 = vmor %vm744, %vm745
    %v747 = vsel %vm746, %v739, %v743
    %v748 = vand.u32 2147483647, %v737
    %vm749 = vcmp.eq.f32.partialorder %v748, 8.507059e+37
    %v750 = vand.u32 %v737, 2147483648
    %v751 = vor.u32 1.1754944e-38, %v750
    %v752 = vsel %vm749, %v751, %v747
    %v753 = vmul.f32 1.0, %v752
    %v754 = vrcp.pop %v738
    %v755 = vmul.f32 %v738, %v754
    %v756 = vsub.f32 1.0, %v755
    %v757 = vmul.f32 %v754, %v756
    %v758 = vadd.f32 %v754, %v757
    %vm759 = vweird.f32 %v738
    %vm760 = vweird.f32 %v754
    %vm761 = vmor %vm759, %vm760
    %v762 = vsel %vm761, %v754, %v758
    %v763 = vand.u32 2147483647, %v738
    %vm764 = vcmp.eq.f32.partialorder %v763, 8.507059e+37
    %v765 = vand.u32 %v738, 2147483648
    %v766 = vor.u32 1.1754944e-38, %v765
    %v767 = vsel %vm764, %v766, %v762
    %v768 = vmul.f32 1.0, %v767
    %v769 = vmul.f32 %v753, 2.0
    %v770 = vmul.f32 %v768, 2.0
    %v771 = vsub.f32 %v769, 1.0
    %v772 = vsub.f32 %v770, 1.0
    %v775 = vrot.slane %v681, 7
    %v776 = vrot.slane %v682, 7
    %v779 = vmul.f32 %v753, %v775
    %v780 = vmul.f32 %v768, %v776
    %783 = vrot.lane.b32.xlu0 %v771, 32
    %v784 = vpop.permute.xlu0 %783
    %785 = vrot.lane.b32.xlu0 %v772, 32
    %v786 = vpop.permute.xlu0 %785
    %v789 = vmul.f32 %v753, %v784
    %v790 = vmul.f32 %v768, %v786
    %793 = vrot.lane.b32.xlu0 %v789, 32
    %v794 = vpop.permute.xlu0 %793
    %795 = vrot.lane.b32.xlu0 %v790, 32
    %v796 = vpop.permute.xlu0 %795
    %v799 = vadd.f32 %v779, %v794
    %v800 = vadd.f32 %v780, %v796
    %v801 = vtanh.pop %v799
    %v802 = vtanh.pop %v800
    %805 = vrot.lane.b32.xlu0 %v801, 32
    %v806 = vpop.permute.xlu0 %805
    %807 = vrot.lane.b32.xlu0 %v802, 32
    %v808 = vpop.permute.xlu0 %807
    %v811 = vmul.f32 %v753, %v806
    %v812 = vmul.f32 %v768, %v808
    %v815 = vrot.slane %v811, 5
    %v816 = vrot.slane %v812, 4
    %v817 = vsel %vm228, %v816, %v815
    %818 = vrot.lane.b32.xlu0 %v817, 64
    %v819 = vpop.permute.xlu0 %818
    %v820 = vsel %vm119, %v819, 0
    %822 = vmatpush.msra.mxu0 0.0
    %823 = vmatpush.msra.mxu0 0.0
    %824 = vmatpush.msra.mxu0 0.0
    %825 = vmatpush.msra.mxu0 0.0
    %826 = vmatpush.msra.mxu0 0.0
    %827 = vmatpush.msra.mxu0 0.0
    %828 = vmatpush.msra.mxu0 0.0
    %829 = vmatpush.msra.mxu0 0.0
    %830 = vmatpush.msra.mxu0 0.0
    %831 = vmatpush.msra.mxu0 0.0
    %832 = vmatpush.msra.mxu0 0.0
    %833 = vmatpush.msra.mxu0 0.0
    %834 = vmatpush.msra.mxu0 %v118
    %835 = vmatpush.msra.mxu0 %v117
    %836 = vmatpush.msra.mxu0 %v116
    %837 = vmatpush.msra.mxu0 %v115
    %838 = vmatmul.f32.gmra.mxu0 %v820
    %v839 = vpop.f32.mrf.mxu0
    %v840 = vadd.f32 0.0, %v839
    %841 = vdwg.mxu0
    %v843 = vrot.slane %v840, 2
    %v844 = vrot.slane %v840, 3
    %v847 = vadd.f32 %v110, %v843
    %v848 = vadd.f32 %v113, %v844
    %v849 = vxor.u32 %v847, 2147483648
    %v850 = vxor.u32 %v848, 2147483648
    %v851 = vmul.f32 %v849, 1.442695
    %v852 = vpow.pop %v851
    %v853 = vmul.f32 %v850, 1.442695
    %v854 = vpow.pop %v853
    %v855 = vadd.f32 %v852, 1.0
    %v856 = vadd.f32 %v854, 1.0
    %v857 = vrcp.pop %v855
    %v858 = vmul.f32 %v855, %v857
    %v859 = vsub.f32 1.0, %v858
    %v860 = vmul.f32 %v857, %v859
    %v861 = vadd.f32 %v857, %v860
    %vm862 = vweird.f32 %v855
    %vm863 = vweird.f32 %v857
    %vm864 = vmor %vm862, %vm863
    %v865 = vsel %vm864, %v857, %v861
    %v866 = vand.u32 2147483647, %v855
    %vm867 = vcmp.eq.f32.partialorder %v866, 8.507059e+37
    %v868 = vand.u32 %v855, 2147483648
    %v869 = vor.u32 1.1754944e-38, %v868
    %v870 = vsel %vm867, %v869, %v865
    %v871 = vmul.f32 1.0, %v870
    %v872 = vrcp.pop %v856
    %v873 = vmul.f32 %v856, %v872
    %v874 = vsub.f32 1.0, %v873
    %v875 = vmul.f32 %v872, %v874
    %v876 = vadd.f32 %v872, %v875
    %vm877 = vweird.f32 %v856
    %vm878 = vweird.f32 %v872
    %vm879 = vmor %vm877, %vm878
    %v880 = vsel %vm879, %v872, %v876
    %v881 = vand.u32 2147483647, %v856
    %vm882 = vcmp.eq.f32.partialorder %v881, 8.507059e+37
    %v883 = vand.u32 %v856, 2147483648
    %v884 = vor.u32 1.1754944e-38, %v883
    %v885 = vsel %vm882, %v884, %v880
    %v886 = vmul.f32 1.0, %v885
    %v887 = vmul.f32 %v871, 2.0
    %v888 = vmul.f32 %v886, 2.0
    %v889 = vsub.f32 %v887, 1.0
    %v890 = vsub.f32 %v888, 1.0
    %v893 = vrot.slane %v799, 7
    %v894 = vrot.slane %v800, 7
    %v897 = vmul.f32 %v871, %v893
    %v898 = vmul.f32 %v886, %v894
    %901 = vrot.lane.b32.xlu0 %v889, 32
    %v902 = vpop.permute.xlu0 %901
    %903 = vrot.lane.b32.xlu0 %v890, 32
    %v904 = vpop.permute.xlu0 %903
    %v907 = vmul.f32 %v871, %v902
    %v908 = vmul.f32 %v886, %v904
    %911 = vrot.lane.b32.xlu0 %v907, 32
    %v912 = vpop.permute.xlu0 %911
    %913 = vrot.lane.b32.xlu0 %v908, 32
    %v914 = vpop.permute.xlu0 %913
    %v917 = vadd.f32 %v897, %v912
    %v918 = vadd.f32 %v898, %v914
    %v919 = vtanh.pop %v917
    %v920 = vtanh.pop %v918
    %923 = vrot.lane.b32.xlu0 %v919, 32
    %v924 = vpop.permute.xlu0 %923
    %925 = vrot.lane.b32.xlu0 %v920, 32
    %v926 = vpop.permute.xlu0 %925
    %v929 = vmul.f32 %v871, %v924
    %v930 = vmul.f32 %v886, %v926
    %v933 = vrot.slane %v929, 6
    %v934 = vrot.slane %v930, 5
    %v935 = vsel %vm228, %v934, %v933
    %936 = vrot.lane.b32.xlu0 %v935, 64
    %v937 = vpop.permute.xlu0 %936
    %v938 = vsel %vm119, %v937, 0
    %940 = vmatpush.msra.mxu0 0.0
    %941 = vmatpush.msra.mxu0 0.0
    %942 = vmatpush.msra.mxu0 0.0
    %943 = vmatpush.msra.mxu0 0.0
    %944 = vmatpush.msra.mxu0 0.0
    %945 = vmatpush.msra.mxu0 0.0
    %946 = vmatpush.msra.mxu0 0.0
    %947 = vmatpush.msra.mxu0 0.0
    %948 = vmatpush.msra.mxu0 0.0
    %949 = vmatpush.msra.mxu0 0.0
    %950 = vmatpush.msra.mxu0 0.0
    %951 = vmatpush.msra.mxu0 0.0
    %952 = vmatpush.msra.mxu0 %v118
    %953 = vmatpush.msra.mxu0 %v117
    %954 = vmatpush.msra.mxu0 %v116
    %955 = vmatpush.msra.mxu0 %v115
    %956 = vmatmul.f32.gmra.mxu0 %v938
    %v957 = vpop.f32.mrf.mxu0
    %v958 = vadd.f32 0.0, %v957
    %959 = vdwg.mxu0
    %v961 = vrot.slane %v958, 1
    %v962 = vrot.slane %v958, 2
    %v965 = vadd.f32 %v110, %v961
    %v966 = vadd.f32 %v113, %v962
    %v967 = vxor.u32 %v965, 2147483648
    %v968 = vxor.u32 %v966, 2147483648
    %v969 = vmul.f32 %v967, 1.442695
    %v970 = vpow.pop %v969
    %v971 = vmul.f32 %v968, 1.442695
    %v972 = vpow.pop %v971
    %v973 = vadd.f32 %v970, 1.0
    %v974 = vadd.f32 %v972, 1.0
    %v975 = vrcp.pop %v973
    %v976 = vmul.f32 %v973, %v975
    %v977 = vsub.f32 1.0, %v976
    %v978 = vmul.f32 %v975, %v977
    %v979 = vadd.f32 %v975, %v978
    %vm980 = vweird.f32 %v973
    %vm981 = vweird.f32 %v975
    %vm982 = vmor %vm980, %vm981
    %v983 = vsel %vm982, %v975, %v979
    %v984 = vand.u32 2147483647, %v973
    %vm985 = vcmp.eq.f32.partialorder %v984, 8.507059e+37
    %v986 = vand.u32 %v973, 2147483648
    %v987 = vor.u32 1.1754944e-38, %v986
    %v988 = vsel %vm985, %v987, %v983
    %v989 = vmul.f32 1.0, %v988
    %v990 = vrcp.pop %v974
    %v991 = vmul.f32 %v974, %v990
    %v992 = vsub.f32 1.0, %v991
    %v993 = vmul.f32 %v990, %v992
    %v994 = vadd.f32 %v990, %v993
    %vm995 = vweird.f32 %v974
    %vm996 = vweird.f32 %v990
    %vm997 = vmor %vm995, %vm996
    %v998 = vsel %vm997, %v990, %v994
    %v999 = vand.u32 2147483647, %v974
    %vm1000 = vcmp.eq.f32.partialorder %v999, 8.507059e+37
    %v1001 = vand.u32 %v974, 2147483648
    %v1002 = vor.u32 1.1754944e-38, %v1001
    %v1003 = vsel %vm1000, %v1002, %v998
    %v1004 = vmul.f32 1.0, %v1003
    %v1005 = vmul.f32 %v989, 2.0
    %v1006 = vmul.f32 %v1004, 2.0
    %v1007 = vsub.f32 %v1005, 1.0
    %v1008 = vsub.f32 %v1006, 1.0
    %v1011 = vrot.slane %v917, 7
    %v1012 = vrot.slane %v918, 7
    %v1015 = vmul.f32 %v989, %v1011
    %v1016 = vmul.f32 %v1004, %v1012
    %1019 = vrot.lane.b32.xlu0 %v1007, 32
    %v1020 = vpop.permute.xlu0 %1019
    %1021 = vrot.lane.b32.xlu0 %v1008, 32
    %v1022 = vpop.permute.xlu0 %1021
    %v1025 = vmul.f32 %v989, %v1020
    %v1026 = vmul.f32 %v1004, %v1022
    %1029 = vrot.lane.b32.xlu0 %v1025, 32
    %v1030 = vpop.permute.xlu0 %1029
    %1031 = vrot.lane.b32.xlu0 %v1026, 32
    %v1032 = vpop.permute.xlu0 %1031
    %v1035 = vadd.f32 %v1015, %v1030
    %v1036 = vadd.f32 %v1016, %v1032
    %v1037 = vtanh.pop %v1035
    %v1038 = vtanh.pop %v1036
    %1041 = vrot.lane.b32.xlu0 %v1037, 32
    %v1042 = vpop.permute.xlu0 %1041
    %1043 = vrot.lane.b32.xlu0 %v1038, 32
    %v1044 = vpop.permute.xlu0 %1043
    %v1047 = vmul.f32 %v989, %v1042
    %v1048 = vmul.f32 %v1004, %v1044
    %v1049 = vld [vmem:[#allocation7] sm:$0xff]
    %v1050 = vld [vmem:[#allocation7 + $0x8] sm:$0xff]
    %v1051 = vld [vmem:[#allocation7 + $0x10] sm:$0xff]
    %v1052 = vld [vmem:[#allocation7 + $0x18] sm:$0xff]
    %v1053 = vld [vmem:[%s5] sm:$0x1]
    %v1055 = vperm.slane %v1053, 0
    %v1059 = vrot.slane %v1047, 7
    %v1060 = vrot.slane %v1048, 6
    %v1061 = vsel %vm228, %v1060, %v1059
    %1062 = vrot.lane.b32.xlu0 %v1061, 64
    %v1063 = vpop.permute.xlu0 %1062
    %v1064 = vsel %vm119, %v1063, 0
    %1066 = vmatpush.msra.mxu0 0.0
    %1067 = vmatpush.msra.mxu0 0.0
    %1068 = vmatpush.msra.mxu0 0.0
    %1069 = vmatpush.msra.mxu0 0.0
    %1070 = vmatpush.msra.mxu0 0.0
    %1071 = vmatpush.msra.mxu0 0.0
    %1072 = vmatpush.msra.mxu0 0.0
    %1073 = vmatpush.msra.mxu0 0.0
    %1074 = vmatpush.msra.mxu0 0.0
    %1075 = vmatpush.msra.mxu0 0.0
    %1076 = vmatpush.msra.mxu0 0.0
    %1077 = vmatpush.msra.mxu0 0.0
    %1078 = vmatpush.msra.mxu0 %v1052
    %1079 = vmatpush.msra.mxu0 %v1051
    %1080 = vmatpush.msra.mxu0 %v1050
    %1081 = vmatpush.msra.mxu0 %v1049
    %1082 = vmatmul.f32.gmra.mxu0 %v1064
    %v1083 = vpop.f32.mrf.mxu0
    %v1084 = vadd.f32 %v1055, %v1083
    %1085 = vdwg.mxu0
    %v1086 = vmax.f32 %v1084, 0.0
    %v1087 = vld [vmem:[%s6] sm:$0xff]
    %v1088 = vld [vmem:[%s6 + $0x8] sm:$0xff]
    %v1089 = vld [vmem:[%s6 + $0x10] sm:$0xff]
    %v1090 = vld [vmem:[%s6 + $0x18] sm:$0xff]
    %v1091 = vld [vmem:[%s7] sm:$0x1]
    %v1093 = vperm.slane %v1091, 0
    %v1096 = vsel %vm119, %v1086, 0
    %1098 = vmatpush.msra.mxu0 0.0
    %1099 = vmatpush.msra.mxu0 0.0
    %1100 = vmatpush.msra.mxu0 0.0
    %1101 = vmatpush.msra.mxu0 0.0
    %1102 = vmatpush.msra.mxu0 0.0
    %1103 = vmatpush.msra.mxu0 0.0
    %1104 = vmatpush.msra.mxu0 0.0
    %1105 = vmatpush.msra.mxu0 0.0
    %1106 = vmatpush.msra.mxu0 0.0
    %1107 = vmatpush.msra.mxu0 0.0
    %1108 = vmatpush.msra.mxu0 0.0
    %1109 = vmatpush.msra.mxu0 0.0
    %1110 = vmatpush.msra.mxu0 %v1090
    %1111 = vmatpush.msra.mxu0 %v1089
    %1112 = vmatpush.msra.mxu0 %v1088
    %1113 = vmatpush.msra.mxu0 %v1087
    %1114 = vmatmul.f32.gmra.mxu0 %v1096
    %v1115 = vpop.f32.mrf.mxu0
    %v1116 = vadd.f32 %v1093, %v1115
    %1117 = vdwg.mxu0
    %vm1118 = vcmask 58368
    %1119 = vst.msk [vmem:[#allocation8] sm:$0x3] %vm1118, %v1116
    // Predicated region
    $region46: #{tpu_custom_call.1} parent=1 // pred_check
      _
    $region47: #{tpu_custom_call.1} parent=1 // pred_check_branch
      %1121 = sbr.rel (0) target = $region49
    $region48: #{tpu_custom_call.1} parent=1 // pred_region
      %1123 = vsyncadd [#allocation4], 0
      %s1125 = sshll.u32 [#allocation8], 4
      %s1126 = int_to_ptr.vmem [resolvable:$true] %s1125
      %s1127 = sshll.u32 %s8, 4
      %s1128 = int_to_ptr.hbm [resolvable:$true] %s1127
      %1130 = dma.vmem_to_hbm [thread:$0]  %s1126, 32, %s1128, [#allocation4]
    $region49: #{tpu_custom_call.1} parent=1 // pred_fallthru
      _
    // Predicated region
    $region50: #{tpu_custom_call.1} parent=1 // pred_check
      _
    $region51: #{tpu_custom_call.1} parent=1 // pred_check_branch
      %1132 = sbr.rel (0) target = $region53
    $region52: #{tpu_custom_call.1} parent=1 // pred_region
      %1134 = dma.done [#allocation4], 32
    $region53: #{tpu_custom_call.1} parent=1 // pred_fallthru
      _
    %1135 = vsyncpa [#allocation3], 1
    %1136 = vsyncpa [#allocation6], 1
    %1137 = vsyncpa [#allocation4], 1

</llo_original>
